<compile_context>
chip_gen: v6e
topology: v6e:2x2x1
jax: 0.10.0
libtpu: 0.0.40
codegen_flags: <defaults>
</compile_context>

<pallas_src>
import functools

import jax
import jax.numpy as jnp
from jax import lax
from jax.experimental import pallas as pl
from jax.experimental.pallas import tpu as pltpu


# ---------------------------------------------------------------------------
# Feature / hardware probes (guarded: any failure falls back to safe defaults).
# ---------------------------------------------------------------------------
@functools.lru_cache(maxsize=None)
def _buffered_supported():
    """True iff pl.BlockSpec(pipeline_mode=pl.Buffered(1)) compiles & runs."""
    try:
        def _probe(x_ref, o_ref):
            o_ref[...] = x_ref[...]

        spec = pl.BlockSpec((8, 128), lambda i: (0, 0),
                            pipeline_mode=pl.Buffered(1))
        fn = pl.pallas_call(
            _probe, grid=(1,), in_specs=[spec],
            out_specs=pl.BlockSpec((8, 128), lambda i: (0, 0)),
            out_shape=jax.ShapeDtypeStruct((8, 128), jnp.float32))
        jax.block_until_ready(fn(jnp.zeros((8, 128), jnp.float32)))
        return True
    except Exception:          # noqa: BLE001 - fall back to plain double-buffering
        return False


@functools.lru_cache(maxsize=None)
def _vmem_limit_bytes():
    """~3/4 of chip VMEM (48 MiB on v7x, 96 MiB on v5e/v6e), capped at 100 MiB."""
    try:
        cap = int(pltpu.get_tpu_info().vmem_capacity_bytes)
        return max(32 << 20, min((cap * 3) // 4, 100 << 20))
    except Exception:          # noqa: BLE001
        return 48 << 20        # safe on v5e / v6e / v7x


def _const_spec(shape):
    """BlockSpec for a grid-invariant (weight) input; single-buffered if possible."""
    index_map = lambda bb, t: (0,) * len(shape)
    if _buffered_supported():
        return pl.BlockSpec(shape, index_map, pipeline_mode=pl.Buffered(1))
    return pl.BlockSpec(shape, index_map)


# ---------------------------------------------------------------------------
# Kernel 1 (runs once): relative-position key projection rk = r @ Wr^T.
# ---------------------------------------------------------------------------
def _r_proj_kernel(r_ref, wr_ref, rk_ref):
    rk_ref[...] = jnp.dot(r_ref[...], wr_ref[...],
                          preferred_element_type=jnp.float32).astype(rk_ref.dtype)


# ---------------------------------------------------------------------------
# Kernel 2 (hoisted out of the attention grid): fused QKV projection.
# One wide matmul per (batch, q-tile); q columns are pre-scaled on the host.
# ---------------------------------------------------------------------------
def _make_qkv_proj_kernel(hd):
    def kernel(w_ref, wqkv_ref, q_ref, k_ref, v_ref):
        cdt = wqkv_ref.dtype
        heads = jnp.dot(w_ref[0].astype(cdt), wqkv_ref[...],
                        preferred_element_type=jnp.float32)      # (TQ, 3*HD)
        q_ref[0] = heads[:, :hd].astype(q_ref.dtype)
        k_ref[0] = heads[:, hd:2 * hd].astype(k_ref.dtype)
        v_ref[0] = heads[:, 2 * hd:].astype(v_ref.dtype)
    return kernel


# ---------------------------------------------------------------------------
# Kernel 3: fused rel-attention + o_net + LN + PositionwiseFF + LN.
# grid = (batch, q_tiles), both axes "parallel".
# ---------------------------------------------------------------------------
def _make_attn_ff_kernel(n_head, d_head, k_len, k_true, r_len, n_bits,
                         mask_mode, q_block, neg_inf=-1e30):
    def kernel(*refs):
        if mask_mode == 2:
            mask_ref, refs = refs[0], refs[1:]
        else:
            mask_ref = None
        (w_ref, q_ref, k_ref, v_ref, rk_ref, rwb_ref, rrb_ref, wo_ref,
         ln1g_ref, ln1b_ref, w1_ref, b1_ref, w2_ref, b2_ref,
         ln2g_ref, ln2b_ref, out_ref) = refs

        cdt = k_ref.dtype                       # MXU compute dtype (bf16)
        f32 = jnp.float32
        tq = q_block
        d_model = wo_ref.shape[1]
        q_start = pl.program_id(1) * q_block

        # --- queries (1/sqrt(d_head) already folded into q proj & biases) ---
        q = q_ref[0].astype(f32)                               # (TQ, HD)
        qw = (q + rwb_ref[...]).astype(cdt)
        qr = (q + rrb_ref[...]).astype(cdt)
        w_res = w_ref[0].astype(f32)                           # (TQ, Dm)

        # --- per-row rotation amounts for the in-VMEM _rel_shift (hoisted
        #     out of the head loop, computed once per tile) -----------------
        row_ids = q_start + lax.broadcasted_iota(jnp.int32, (tq, 1), 0)
        shift_amt = (r_len - 1) - row_ids                      # left-rotation/row
        take_bits = [(shift_amt & (1 << bit)) != 0 for bit in range(n_bits)]

        if mask_mode == 1:        # causal mask built in-kernel (no mask DMA)
            col_ids = lax.broadcasted_iota(jnp.int32, (tq, k_len), 1)
            masked = col_ids > row_ids
        elif mask_mode == 2:      # explicit (qlen, klen) mask (bf16, pre-padded)
            masked = mask_ref[...] != 0
        else:
            masked = None         # NOTE: matches reference only under a mask
        if mask_mode == 0 and k_true < k_len:   # hide host-side pad columns
            pad_cols = lax.broadcasted_iota(jnp.int32, (tq, k_len), 1) >= k_true
            masked = pad_cols

        contract = (((1,), (1,)), ((), ()))
        attn_acc = jnp.zeros((tq, d_model), f32)
        # H is small & static; per-head temporaries die each iteration, which
        # bounds the (TQ, K) f32 working set without a flash-style K loop.
        for h in range(n_head):
            sl = slice(h * d_head, (h + 1) * d_head)
            k_h = k_ref[0, :, sl]                              # (K, Dh) bf16
            v_h = v_ref[0, :, sl]
            rk_h = rk_ref[:, sl]                               # (K, Dh) bf16
            ac = lax.dot_general(qw[:, sl], k_h, contract,
                                 preferred_element_type=f32)   # (TQ, K)
            bd = lax.dot_general(qr[:, sl], rk_h, contract,
                                 preferred_element_type=f32)   # (TQ, K)
            # _rel_shift at width K: row i rotated left by (R-1-i) via log2(R)
            # static power-of-two rotations + per-row selects.  Wrapped-in
            # entries land only on j > i, which the mask discards.
            for bit in range(n_bits):
                sh = 1 << bit
                rolled = jnp.concatenate([bd[:, sh:], bd[:, :sh]], axis=1)
                bd = jnp.where(take_bits[bit], rolled, bd)
            s = ac + bd
            if masked is not None:
                s = jnp.where(masked, neg_inf, s)
            m = jnp.max(s, axis=-1, keepdims=True)
            e = jnp.exp(s - m)
            inv = 1.0 / jnp.sum(e, axis=-1, keepdims=True)     # exact reciprocal
            av = jnp.dot(e.astype(cdt), v_h,
                         preferred_element_type=f32)           # (TQ, Dh)
            # fold this head straight into the o_net output: lane-dense f32
            # accumulate, no (TQ, HD) scratch / per-head masked stores.
            attn_acc = attn_acc + jnp.dot((av * inv).astype(cdt), wo_ref[sl, :],
                                          preferred_element_type=f32)

        def layer_norm(x, gamma, beta):
            mu = jnp.mean(x, axis=-1, keepdims=True)
            var = jnp.mean(jnp.square(x - mu), axis=-1, keepdims=True)
            return (x - mu) * lax.rsqrt(var + 1e-5) * gamma + beta

        y = layer_norm(w_res + attn_acc, ln1g_ref[...], ln1b_ref[...])

        # PositionwiseFF (Linear -> ReLU -> Linear), residual, post-LN.
        h1 = jnp.maximum(
            jnp.dot(y.astype(cdt), w1_ref[...],
                    preferred_element_type=f32) + b1_ref[...], 0.0)
        core = jnp.dot(h1.astype(cdt), w2_ref[...],
                       preferred_element_type=f32) + b2_ref[...]
        out_ref[0] = layer_norm(y + core, ln2g_ref[...],
                                ln2b_ref[...]).astype(out_ref.dtype)

    return kernel


# ---------------------------------------------------------------------------
# Wrapper
# ---------------------------------------------------------------------------
def rel_partial_learnable_decoder_layer(dec_inp, r, r_w_bias, r_r_bias, params,
                                        dec_attn_mask=None, causal=False,
                                        q_block=None,
                                        compute_dtype=jnp.bfloat16):
    """Transformer-XL RelPartialLearnableDecoderLayer forward (inference).

    dec_inp: (qlen, bsz, d_model), r: (rlen, d_model), biases: (n_head, d_head).
    params holds the raw PyTorch-layout weights (see __main__).  causal=True
    builds the standard causal mask in-kernel (dec_attn_mask is then ignored);
    otherwise a batch-independent (qlen, klen) / (qlen, klen, 1) mask may be
    supplied.
    """
    Q, B, Dm = dec_inp.shape
    R = r.shape[0]
    H, Dh = r_w_bias.shape
    HD = H * Dh
    K = Q
    # TODO(synk): mems (recurrence cache) path not implemented (needs klen > qlen).
    if R != K:
        raise NotImplementedError("rlen != qlen (mems path) not supported")
    Din = params["ff_w1"].shape[0]
    scale = 1.0 / (Dh ** 0.5)
    f32 = jnp.float32
    cdt = compute_dtype
    in_dtype = dec_inp.dtype

    # ---- q-tile size (multiple of 8); non-dividing Q is handled by padding --
    if q_block is None:
        q_block = Q if Q <= 256 else 256
    q_block = max(1, min(q_block, Q))
    if q_block < Q and q_block % 8 != 0:
        q_block = max(8, (q_block // 8) * 8)
    q_tiles = pl.cdiv(Q, q_block)
    Q_pad = q_tiles * q_block
    pad = Q_pad - Q

    n_bits = (R - 1).bit_length() if R > 1 else 0

    # ---- host-side weight prep (scale folded into q projection & biases) ----
    qkv_w = params["qkv_w"].astype(f32)                        # (3HD, Dm) torch
    wqkv = jnp.concatenate([qkv_w[:HD] * scale, qkv_w[HD:]],
                           axis=0).T.astype(cdt)               # (Dm, 3HD)
    wr = params["r_w"].T.astype(cdt)                           # (Dm, HD)
    wo = params["o_w"].T.astype(cdt)                           # (HD, Dm)
    w1 = params["ff_w1"].T.astype(cdt)                         # (Dm, Din)
    w2 = params["ff_w2"].T.astype(cdt)                         # (Din, Dm)
    b1 = params["ff_b1"].reshape(1, Din).astype(f32)
    b2 = params["ff_b2"].reshape(1, Dm).astype(f32)
    ln1_g = params["ln1_g"].reshape(1, Dm).astype(f32)
    ln1_b = params["ln1_b"].reshape(1, Dm).astype(f32)
    ln2_g = params["ln2_g"].reshape(1, Dm).astype(f32)
    ln2_b = params["ln2_b"].reshape(1, Dm).astype(f32)
    rwb = (r_w_bias.reshape(1, HD) * scale).astype(f32)
    rrb = (r_r_bias.reshape(1, HD) * scale).astype(f32)

    w_bqd = jnp.transpose(dec_inp, (1, 0, 2))                  # (B, Q, Dm)
    if pad:
        w_bqd = jnp.pad(w_bqd, ((0, 0), (0, pad), (0, 0)))

    cparams = pltpu.CompilerParams(
        dimension_semantics=("parallel", "parallel"),
        vmem_limit_bytes=_vmem_limit_bytes())

    # ---- hoisted relative-position key projection (batch independent) -------
    rk = pl.pallas_call(
        _r_proj_kernel,
        out_shape=jax.ShapeDtypeStruct((R, HD), cdt),
    )(r.astype(cdt), wr)
    if pad:
        rk = jnp.concatenate([rk, jnp.zeros((pad, HD), rk.dtype)], axis=0)

    # ---- hoisted QKV projection: computed once per (batch, q-tile) ----------
    q_all, k_all, v_all = pl.pallas_call(
        _make_qkv_proj_kernel(HD),
        grid=(B, q_tiles),
        in_specs=[pl.BlockSpec((1, q_block, Dm), lambda bb, t: (bb, t, 0)),
                  _const_spec((Dm, 3 * HD))],
        out_specs=(pl.BlockSpec((1, q_block, HD), lambda bb, t: (bb, t, 0)),
                   pl.BlockSpec((1, q_block, HD), lambda bb, t: (bb, t, 0)),
                   pl.BlockSpec((1, q_block, HD), lambda bb, t: (bb, t, 0))),
        out_shape=(jax.ShapeDtypeStruct((B, Q_pad, HD), cdt),
                   jax.ShapeDtypeStruct((B, Q_pad, HD), cdt),
                   jax.ShapeDtypeStruct((B, Q_pad, HD), cdt)),
        compiler_params=cparams,
    )(w_bqd, wqkv)

    # ---- mask mode -----------------------------------------------------------
    if causal:
        mask_mode = 1
    elif dec_attn_mask is not None:
        mask_mode = 2
    else:
        mask_mode = 0   # NOTE: like the reference, unmasked j > i positions are
                        # implementation-defined; Transformer-XL always applies
                        # a causal-style mask here.

    kernel = _make_attn_ff_kernel(H, Dh, Q_pad, K, R, n_bits,
                                  mask_mode, q_block)

    in_specs = []
    inputs = []
    if mask_mode == 2:
        m = dec_attn_mask
        if m.ndim == 3:
            if m.shape[2] != 1:
                raise NotImplementedError("per-batch attention masks not supported")
            m = m[:, :, 0]
        if m.shape != (Q, K):
            raise ValueError("dec_attn_mask must have shape (qlen, klen[, 1])")
        mvals = (m != 0)
        if pad:
            mvals = jnp.pad(mvals, ((0, pad), (0, pad)), constant_values=True)
        in_specs.append(pl.BlockSpec((q_block, Q_pad), lambda bb, t: (t, 0)))
        inputs.append(mvals.astype(cdt))                       # bf16: 2x less DMA

    in_specs += [
        pl.BlockSpec((1, q_block, Dm), lambda bb, t: (bb, t, 0)),   # residual tile
        pl.BlockSpec((1, q_block, HD), lambda bb, t: (bb, t, 0)),   # q tile
        pl.BlockSpec((1, Q_pad, HD), lambda bb, t: (bb, 0, 0)),     # k (per batch)
        pl.BlockSpec((1, Q_pad, HD), lambda bb, t: (bb, 0, 0)),     # v (per batch)
        _const_spec((Q_pad, HD)),                                   # rk (shared)
        _const_spec((1, HD)), _const_spec((1, HD)),                 # rwb, rrb (scaled)
        _const_spec((HD, Dm)),                                      # Wo
        _const_spec((1, Dm)), _const_spec((1, Dm)),                 # LN1 gamma/beta
        _const_spec((Dm, Din)), _const_spec((1, Din)),              # FF W1, b1
        _const_spec((Din, Dm)), _const_spec((1, Dm)),               # FF W2, b2
        _const_spec((1, Dm)), _const_spec((1, Dm)),                 # LN2 gamma/beta
    ]
    inputs += [w_bqd, q_all, k_all, v_all, rk, rwb, rrb, wo,
               ln1_g, ln1_b, w1, b1, w2, b2, ln2_g, ln2_b]

    out_bqd = pl.pallas_call(
        kernel,
        grid=(B, q_tiles),
        in_specs=in_specs,
        out_specs=pl.BlockSpec((1, q_block, Dm), lambda bb, t: (bb, t, 0)),
        out_shape=jax.ShapeDtypeStruct((B, Q_pad, Dm), in_dtype),   # model dtype out
        compiler_params=cparams,
    )(*inputs)

    return jnp.transpose(out_bqd[:, :Q, :], (1, 0, 2))


# ---------------------------------------------------------------------------
# Pure-JAX reference (mirrors the PyTorch forward), for verification.
# ---------------------------------------------------------------------------
def reference_forward(dec_inp, r, r_w_bias, r_r_bias, params, dec_attn_mask):
    Q, B, Dm = dec_inp.shape
    R = r.shape[0]
    H, Dh = r_w_bias.shape
    HD = H * Dh
    scale = 1.0 / (Dh ** 0.5)

    w_heads = dec_inp @ params["qkv_w"].T                      # (Q, B, 3HD)
    r_head_k = r @ params["r_w"].T                             # (R, HD)
    q = w_heads[..., :HD].reshape(Q, B, H, Dh)
    k = w_heads[..., HD:2 * HD].reshape(Q, B, H, Dh)
    v = w_heads[..., 2 * HD:].reshape(Q, B, H, Dh)
    rk = r_head_k.reshape(R, H, Dh)

    AC = jnp.einsum('ibnd,jbnd->ijbn', q + r_w_bias, k)
    BD = jnp.einsum('ibnd,jnd->ijbn', q + r_r_bias, rk)
    zp = jnp.zeros((Q, 1, B, H), BD.dtype)
    xp = jnp.concatenate([zp, BD], axis=1).reshape(R + 1, Q, B, H)
    BD = xp[1:].reshape(Q, R, B, H)                            # _rel_shift

    score = (AC + BD) * scale
    if dec_attn_mask is not None:
        score = jnp.where(dec_attn_mask[:, :, :, None] > 0, -jnp.inf, score)
    prob = jax.nn.softmax(score, axis=1)
    vec = jnp.einsum('ijbn,jbnd->ibnd', prob, v).reshape(Q, B, HD)
    attn_out = vec @ params["o_w"].T

    def ln(x, g, b):
        mu = x.mean(-1, keepdims=True)
        var = ((x - mu) ** 2).mean(-1, keepdims=True)
        return (x - mu) / jnp.sqrt(var + 1e-5) * g + b

    y = ln(dec_inp + attn_out, params["ln1_g"], params["ln1_b"])
    h1 = jax.nn.relu(y @ params["ff_w1"].T + params["ff_b1"])
    core = h1 @ params["ff_w2"].T + params["ff_b2"]
    return ln(y + core, params["ln2_g"], params["ln2_b"])


if __name__ == "__main__":
    # small shapes consistent with the module
    n_head, d_model, d_head, d_inner = 4, 32, 8, 64
    H, Dm, Dh, Din = n_head, d_model, d_head, d_inner
    HD = H * Dh

    key = jax.random.PRNGKey(0)
    ks = jax.random.split(key, 16)

    # deterministic synthetic parameters (PyTorch weight layouts)
    params = {
        "qkv_w": jax.random.normal(ks[0], (3 * HD, Dm), jnp.float32) * 0.1,
        "r_w":   jax.random.normal(ks[1], (HD, Dm), jnp.float32) * 0.1,
        "o_w":   jax.random.normal(ks[2], (Dm, HD), jnp.float32) * 0.1,
        "ff_w1": jax.random.normal(ks[3], (Din, Dm), jnp.float32) * 0.1,
        "ff_b1": jax.random.normal(ks[4], (Din,), jnp.float32) * 0.1,
        "ff_w2": jax.random.normal(ks[5], (Dm, Din), jnp.float32) * 0.1,
        "ff_b2": jax.random.normal(ks[6], (Dm,), jnp.float32) * 0.1,
        "ln1_g": jnp.ones((Dm,), jnp.float32),
        "ln1_b": jnp.zeros((Dm,), jnp.float32),
        "ln2_g": jnp.ones((Dm,), jnp.float32),
        "ln2_b": jnp.zeros((Dm,), jnp.float32),
    }
    r_w_bias = jax.random.normal(ks[7], (H, Dh), jnp.float32) * 0.1
    r_r_bias = jax.random.normal(ks[8], (H, Dh), jnp.float32) * 0.1

    tol = 5e-2
    errs = []

    # Case 1: qlen=8, bsz=2 -- single q-tile; explicit (qlen, klen, 1) mask and
    # the in-kernel causal mask paths.
    Q1, B1 = 8, 2
    dec_inp1 = jax.random.normal(ks[9], (Q1, B1, Dm), jnp.float32)
    r1 = jax.random.normal(ks[10], (Q1, Dm), jnp.float32)
    mask1 = jnp.triu(jnp.ones((Q1, Q1), jnp.float32), k=1)[:, :, None]
    out1_m = rel_partial_learnable_decoder_layer(
        dec_inp1, r1, r_w_bias, r_r_bias, params, dec_attn_mask=mask1)
    out1_c = rel_partial_learnable_decoder_layer(
        dec_inp1, r1, r_w_bias, r_r_bias, params, causal=True)
    ref1 = reference_forward(dec_inp1, r1, r_w_bias, r_r_bias, params, mask1)
    out1_m, out1_c, ref1 = jax.block_until_ready((out1_m, out1_c, ref1))
    errs.append(float(jnp.max(jnp.abs(out1_m - ref1))))
    errs.append(float(jnp.max(jnp.abs(out1_c - ref1))))

    # Case 2: qlen=24, bsz=2, q_block=16 -- multiple q-tiles plus a padded
    # remainder tile, causal mask generated in-kernel.
    Q2, B2 = 24, 2
    dec_inp2 = jax.random.normal(ks[11], (Q2, B2, Dm), jnp.float32)
    r2 = jax.random.normal(ks[12], (Q2, Dm), jnp.float32)
    mask2 = jnp.triu(jnp.ones((Q2, Q2), jnp.float32), k=1)[:, :, None]
    out2 = rel_partial_learnable_decoder_layer(
        dec_inp2, r2, r_w_bias, r_r_bias, params, causal=True, q_block=16)
    ref2 = reference_forward(dec_inp2, r2, r_w_bias, r_r_bias, params, mask2)
    out2, ref2 = jax.block_until_ready((out2, ref2))
    errs.append(float(jnp.max(jnp.abs(out2 - ref2))))

    if not all(e < tol for e in errs):
        raise AssertionError(f"Pallas output mismatch vs reference: {errs}")
    print("KERNEL_OK")
</pallas_src>

<mosaic_0001>
module attributes {stable_mosaic.version = 11 : i64} {
  func.func @_r_proj_kernel(%arg0: memref<8x32xbf16, #tpu.memory_space<vmem>>, %arg1: memref<32x32xbf16, #tpu.memory_space<vmem>>, %arg2: memref<8x32xbf16, #tpu.memory_space<vmem>>) attributes {dimension_semantics = [], scalar_prefetch = 0 : i64, scratch_operands = 0 : i64, tpu.core_type = #tpu.core_type<tc>} {
    %c0 = arith.constant 0 : index
    %c0_0 = arith.constant 0 : index
    %0 = vector.load %arg0[%c0, %c0_0] : memref<8x32xbf16, #tpu.memory_space<vmem>>, vector<8x32xbf16>
    %c0_1 = arith.constant 0 : index
    %c0_2 = arith.constant 0 : index
    %1 = vector.load %arg1[%c0_1, %c0_2] : memref<32x32xbf16, #tpu.memory_space<vmem>>, vector<32x32xbf16>
    %cst = arith.constant dense<0.000000e+00> : vector<8x32xf32>
    %2 = tpu.matmul %0, %1, %cst {dimension_numbers = #tpu.dot_dimension_numbers<[1], [0], [0], [1], [0, 0, 1, 1], [], []>} : vector<8x32xbf16>, vector<32x32xbf16>, vector<8x32xf32> -> vector<8x32xf32>
    %3 = arith.truncf %2 : vector<8x32xf32> to vector<8x32xbf16>
    %c0_3 = arith.constant 0 : index
    %c0_4 = arith.constant 0 : index
    %4 = vector.load %arg2[%c0_3, %c0_4] : memref<8x32xbf16, #tpu.memory_space<vmem>>, vector<8x32xbf16>
    tpu.vector_store %arg2[%c0_3, %c0_4], %3 {strides = array<i32>} : memref<8x32xbf16, #tpu.memory_space<vmem>>, vector<8x32xbf16>,
    return
  }
}

</mosaic_0001>

<llo_original>
// kernel: tpu_custom_call.1
$region0: #{tpu_custom_call.1}
  #allocation0 [shape = 'u32[]', space=smem, size = 0x4, offset = 0x4, fixed_abs, tag = 'smem constant byte address 0x4 - core index']
  #allocation1 [shape = 'u32[144,128]{1,0:T(1,128)}', space=vmem, size = 0x12000, scoped, tag = 'internal scratch']
  %s0 = inlined_call_operand.hbm [shape: bf16[8,32], index: 0, kind: input, shape index: {}]
  %s1 = inlined_call_operand.hbm [shape: bf16[32,32], index: 1, kind: input, shape index: {}]
  %s2 = inlined_call_operand.hbm [shape: bf16[8,32], index: 2, kind: output, shape index: {}]
  %s3 = sld [smem:[#allocation0]]
  $region26: #{tpu_custom_call.1} parent=0
    _
  %s5 = ssub.s32 1, %s3
  %s6 = scalar_select 0, %s5, %s3
  $region1: #{tpu_custom_call.1} parent=0
    #allocation2 [shape = 'u8[2048]{0}', space=vmem, size = 0x800, scoped, tag = 'input window, operand 0, single buffered']
    #allocation3 [shape = 's32[1]{0}', space=sflag, size = 0x4, scoped, tag = 'scoped memory for tpu_custom_call.1']
    #allocation4 [shape = 's32[1]{0}', space=sflag, size = 0x4, scoped, tag = 'scoped memory for tpu_custom_call.1']
    #allocation5 [shape = 'u8[8192]{0}', space=vmem, size = 0x2000, scoped, tag = 'input window, operand 1, single buffered']
    #allocation6 [shape = 's32[1]{0}', space=sflag, size = 0x4, scoped, tag = 'scoped memory for tpu_custom_call.1']
    #allocation7 [shape = 'u8[2048]{0}', space=vmem, size = 0x800, scoped, tag = 'output window, operand 0, single buffered']
    %7 = vsyncpa [#allocation3], 0
    %8 = vsyncpa [#allocation6], 0
    %9 = vsyncpa [#allocation4], 0
    // Predicated region
    $region2: #{tpu_custom_call.1} parent=1 // pred_check
      _
    $region3: #{tpu_custom_call.1} parent=1 // pred_check_branch
      %11 = sbr.rel (0) target = $region5
    $region4: #{tpu_custom_call.1} parent=1 // pred_region
      %s13 = ssub.s32 64, 64
      %14 = vsyncadd [#allocation3], %s13
      %s16 = sshll.u32 [#allocation2], 4
      %s17 = int_to_ptr.vmem [resolvable:$true] %s16
      %19 = dma.hbm_to_vmem [thread:$0]  %s0, 64, %s17, [#allocation3]
    $region5: #{tpu_custom_call.1} parent=1 // pred_fallthru
      _
    // Predicated region
    $region6: #{tpu_custom_call.1} parent=1 // pred_check
      _
    $region7: #{tpu_custom_call.1} parent=1 // pred_check_branch
      %21 = sbr.rel (0) target = $region9
    $region8: #{tpu_custom_call.1} parent=1 // pred_region
      %s23 = ssub.s32 256, 256
      %24 = vsyncadd [#allocation6], %s23
      %s25 = sshll.u32 [#allocation5], 4
      %s26 = int_to_ptr.vmem [resolvable:$true] %s25
      %31 = dma.hbm_to_vmem [thread:$0]  %s1, 256, %s26, [#allocation6], 64, 64, 4
    $region9: #{tpu_custom_call.1} parent=1 // pred_fallthru
      _
    // Predicated region
    $region10: #{tpu_custom_call.1} parent=1 // pred_check
      _
    $region11: #{tpu_custom_call.1} parent=1 // pred_check_branch
      %33 = sbr.rel (0) target = $region13
    $region12: #{tpu_custom_call.1} parent=1 // pred_region
      %34 = dma.done [#allocation3], 64
    $region13: #{tpu_custom_call.1} parent=1 // pred_fallthru
      _
    // Predicated region
    $region14: #{tpu_custom_call.1} parent=1 // pred_check
      _
    $region15: #{tpu_custom_call.1} parent=1 // pred_check_branch
      %36 = sbr.rel (0) target = $region17
    $region16: #{tpu_custom_call.1} parent=1 // pred_region
      %37 = dma.done [#allocation6], 256
    $region17: #{tpu_custom_call.1} parent=1 // pred_fallthru
      _
    %v39 = vld [vmem:[#allocation2] sm:$0xf]
    %v40 = vld [vmem:[#allocation5] sm:$0xf]
    %v41 = vld [vmem:[#allocation5 + $0x4] sm:$0xf]
    %v42 = vld [vmem:[#allocation5 + $0x8] sm:$0xf]
    %v43 = vld [vmem:[#allocation5 + $0xc] sm:$0xf]
    %v48 = vunpack.c.l.b16 %v40
    %v49 = vunpack.c.l.b16 %v41
    %v50 = vunpack.c.l.b16 %v42
    %v51 = vunpack.c.l.b16 %v43
    %v52 = vpack.c.b16 %v49, %v48
    %v53 = vpack.c.b16 %v51, %v50
    %vm56 = vcmask 261120
    %v58 = vsel %vm56, %v39, 0
    %60 = vmatprep.subr.bf16.mxu0 0
    %61 = vmatpush1.bf16.msra.mxu0 0
    %62 = vmatprep.subr.bf16.mxu0 0
    %63 = vmatpush1.bf16.msra.mxu0 0
    %64 = vmatprep.subr.bf16.mxu0 0
    %65 = vmatpush1.bf16.msra.mxu0 0
    %66 = vmatprep.subr.bf16.mxu0 0
    %67 = vmatpush1.bf16.msra.mxu0 0
    %68 = vmatprep.subr.bf16.mxu0 0
    %69 = vmatpush1.bf16.msra.mxu0 0
    %70 = vmatprep.subr.bf16.mxu0 0
    %71 = vmatpush1.bf16.msra.mxu0 0
    %72 = vmatprep.subr.bf16.mxu0 0
    %73 = vmatpush1.bf16.msra.mxu0 %v53
    %74 = vmatprep.subr.bf16.mxu0 0
    %75 = vmatpush1.bf16.msra.mxu0 %v52
    %76 = vmatprep.subr.bf16.mxu0 0
    %77 = vmatpush2.bf16.msra.mxu0 0
    %78 = vmatprep.subr.bf16.mxu0 0
    %79 = vmatpush2.bf16.msra.mxu0 0
    %80 = vmatprep.subr.bf16.mxu0 0
    %81 = vmatpush2.bf16.msra.mxu0 0
    %82 = vmatprep.subr.bf16.mxu0 0
    %83 = vmatpush2.bf16.msra.mxu0 0
    %84 = vmatprep.subr.bf16.mxu0 0
    %85 = vmatpush2.bf16.msra.mxu0 0
    %86 = vmatprep.subr.bf16.mxu0 0
    %87 = vmatpush2.bf16.msra.mxu0 0
    %88 = vmatprep.subr.bf16.mxu0 0
    %89 = vmatpush2.bf16.msra.mxu0 0
    %90 = vmatprep.subr.bf16.mxu0 0
    %91 = vmatpush2.bf16.msra.mxu0 0
    %92 = vmatprep.mubr.bf16.mxu0 0
    %93 = vmatmul.mubr.bf16.gmra.mxu0 %v58
    %v94 = vpop.f32.mrf.mxu0
    %v95 = vadd.f32 0.0, %v94
    %v96 = vpop.f32.mrf.mxu0
    %v97 = vpop.f32.mrf.mxu0
    %v98 = vpop.f32.mrf.mxu0
    %99 = vdwg.mxu0
    %v100 = vpack.c.bf16 %v95, %v95
    %vm101 = vcmask 257024
    %102 = vst.msk [vmem:[#allocation7] sm:$0xf] %vm101, %v100
    // Predicated region
    $region18: #{tpu_custom_call.1} parent=1 // pred_check
      _
    $region19: #{tpu_custom_call.1} parent=1 // pred_check_branch
      %104 = sbr.rel (0) target = $region21
    $region20: #{tpu_custom_call.1} parent=1 // pred_region
      %s106 = ssub.s32 64, 64
      %107 = vsyncadd [#allocation4], %s106
      %s109 = sshll.u32 [#allocation7], 4
      %s110 = int_to_ptr.vmem [resolvable:$true] %s109
      %112 = dma.vmem_to_hbm [thread:$0]  %s110, 64, %s2, [#allocation4]
    $region21: #{tpu_custom_call.1} parent=1 // pred_fallthru
      _
    // Predicated region
    $region22: #{tpu_custom_call.1} parent=1 // pred_check
      _
    $region23: #{tpu_custom_call.1} parent=1 // pred_check_branch
      %114 = sbr.rel (0) target = $region25
    $region24: #{tpu_custom_call.1} parent=1 // pred_region
      %115 = dma.done [#allocation4], 64
    $region25: #{tpu_custom_call.1} parent=1 // pred_fallthru
      _
    %116 = vsyncpa [#allocation3], 1
    %117 = vsyncpa [#allocation6], 1
    %118 = vsyncpa [#allocation4], 1

</llo_original>
